<compile_context>
chip_gen: v7x
topology: tpu7x:2x2x1
jax: 0.10.0
libtpu: 0.0.40
codegen_flags: <defaults>
</compile_context>

<pallas_src>
import functools

import jax
import jax.numpy as jnp
from jax import lax
from jax.experimental import pallas as pl
from jax.experimental.pallas import tpu as pltpu

N_NODES = 3      # graph nodes
F_IN = 2         # num_node_features
F_HID = 5        # hidden size of conv1
N_PAD = 8        # node axis padded to a sublane multiple
K_PAD = 8        # feature / hidden contraction dims padded to a sublane multiple

_VMEM = pl.BlockSpec(memory_space=pltpu.MemorySpace.VMEM)


# ----------------------------- Pallas kernels -------------------------------

def gcn_ode_kernel(mats_ref, bias_ref, x_ref, o_ref):
    """One evaluation of dx/dt = conv2(relu(conv1(x)))."""
    a = mats_ref[0]                                   # (N_PAD, N_PAD)  Ahat
    w1 = mats_ref[1]                                  # (K_PAD, K_PAD)  W1 pad
    w2 = mats_ref[2]                                  # (K_PAD, K_PAD)  W2 pad
    b1 = bias_ref[0:1, :]                             # (1, K_PAD)
    b2 = bias_ref[1:2, :]                             # (1, K_PAD)

    xw1 = jnp.dot(x_ref[...], w1, preferred_element_type=jnp.float32)
    h = jnp.maximum(jnp.dot(a, xw1, preferred_element_type=jnp.float32) + b1, 0.0)
    hw2 = jnp.dot(h, w2, preferred_element_type=jnp.float32)
    out = jnp.dot(a, hw2, preferred_element_type=jnp.float32) + b2
    o_ref[...] = out.astype(o_ref.dtype)


def gcn_euler_kernel(mats_ref, bias_ref, x0_ref, o_ref, *, dt, n_steps):
    """n_steps of explicit Euler on dx/dt = GCN(x), all inside one kernel call.

    Weights / adjacency are loaded into vregs once and reused every step; only
    the final state is stored.  Padded rows/cols are mathematically inert for
    the visible [:N_NODES, :F_IN] slice (Ahat's padded columns are zero).
    """
    a = mats_ref[0]
    w1 = mats_ref[1]
    w2 = mats_ref[2]
    b1 = bias_ref[0:1, :]
    b2 = bias_ref[1:2, :]

    def step(_, x):
        xw1 = jnp.dot(x, w1, preferred_element_type=jnp.float32)
        h = jnp.maximum(jnp.dot(a, xw1, preferred_element_type=jnp.float32) + b1, 0.0)
        hw2 = jnp.dot(h, w2, preferred_element_type=jnp.float32)
        dx = jnp.dot(a, hw2, preferred_element_type=jnp.float32) + b2
        return x + dt * dx

    o_ref[...] = lax.fori_loop(0, n_steps, step, x0_ref[...], unroll=4)


# ------------------------------- wrappers ------------------------------------

def prepare_params(a_hat, w1, b1, w2, b2):
    """Pad the call-invariant operands ONCE (hoisted out of the per-step path)."""
    mats = (jnp.zeros((3, K_PAD, K_PAD), jnp.float32)
            .at[0, :N_NODES, :N_NODES].set(a_hat)
            .at[1, :F_IN, :F_HID].set(w1)
            .at[2, :F_HID, :F_IN].set(w2))
    bias = (jnp.zeros((2, K_PAD), jnp.float32)
            .at[0, :F_HID].set(b1)
            .at[1, :F_IN].set(b2))
    return mats, bias


def _pad_x(x):
    n, f = x.shape
    return jnp.zeros((N_PAD, K_PAD), jnp.float32).at[:n, :f].set(x)


@jax.jit
def ode_func_forward(t, x, mats, bias):
    """Pallas-backed ODEFunc.forward (t unused, matching the PyTorch module)."""
    del t
    n, f = x.shape
    out_pad = pl.pallas_call(
        gcn_ode_kernel,
        out_shape=jax.ShapeDtypeStruct((N_PAD, K_PAD), jnp.float32),
        in_specs=[_VMEM] * 3,
        out_specs=_VMEM,
    )(mats, bias, _pad_x(x))
    return out_pad[:n, :f]


@functools.partial(jax.jit, static_argnames=("dt", "n_steps"))
def ode_euler_integrate(x, mats, bias, *, dt, n_steps):
    """Whole Euler trajectory in a single pallas_call (amortized launch/DMA)."""
    n, f = x.shape
    kernel = functools.partial(gcn_euler_kernel, dt=dt, n_steps=n_steps)
    out_pad = pl.pallas_call(
        kernel,
        out_shape=jax.ShapeDtypeStruct((N_PAD, K_PAD), jnp.float32),
        in_specs=[_VMEM] * 3,
        out_specs=_VMEM,
    )(mats, bias, _pad_x(x))
    return out_pad[:n, :f]


# --------------------------- graph / parameters ------------------------------

def build_norm_adj(edge_index, num_nodes):
    """Dense D^{-1/2}(A+I)D^{-1/2}, matching PyG gcn_norm with add_self_loops."""
    src, dst = edge_index[0], edge_index[1]
    a = jnp.zeros((num_nodes, num_nodes), jnp.float32).at[dst, src].add(1.0)
    a = a + jnp.eye(num_nodes, dtype=jnp.float32)
    deg = a.sum(axis=1)
    d_inv_sqrt = jnp.where(deg > 0, lax.rsqrt(deg), 0.0)   # guard isolated nodes
    return a * d_inv_sqrt[:, None] * d_inv_sqrt[None, :]


def glorot(key, shape):
    fan_in, fan_out = shape
    limit = jnp.sqrt(6.0 / (fan_in + fan_out))
    return jax.random.uniform(key, shape, jnp.float32, -limit, limit)


def init_params(key, f_in, f_hid):
    k1, k2, k3, k4 = jax.random.split(key, 4)
    w1 = glorot(k1, (f_in, f_hid))                   # GCNConv(2 -> 5)
    w2 = glorot(k2, (f_hid, f_in))                   # GCNConv(5 -> 2)
    # PyG initialises biases to zero; use small non-zero values so the bias
    # path of the kernel is actually exercised by the correctness check.
    b1 = 0.1 * jax.random.normal(k3, (f_hid,), jnp.float32)
    b2 = 0.1 * jax.random.normal(k4, (f_in,), jnp.float32)
    return w1, b1, w2, b2


def reference_forward(x, a_hat, w1, b1, w2, b2):
    h = jnp.maximum(a_hat @ (x @ w1) + b1, 0.0)
    return a_hat @ (h @ w2) + b2


def reference_euler(x, a_hat, w1, b1, w2, b2, dt, n_steps):
    for _ in range(n_steps):
        x = x + dt * reference_forward(x, a_hat, w1, b1, w2, b2)
    return x


# --------------------------------- main ---------------------------------------

if __name__ == "__main__":
    # Inputs mirroring the PyTorch script.
    edge_index = jnp.array([[0, 1, 1, 2], [1, 0, 2, 1]], dtype=jnp.int32)
    x = jnp.array([[3.0, 2.0], [4.0, 3.0], [5.0, 1.0]], dtype=jnp.float32)
    t = jnp.array(0.0, dtype=jnp.float32)            # unused by forward

    a_hat = build_norm_adj(edge_index, N_NODES)
    w1, b1, w2, b2 = init_params(jax.random.PRNGKey(0), F_IN, F_HID)

    # Constant operands padded / packed once (hoisted out of the per-step path).
    mats, bias = prepare_params(a_hat, w1, b1, w2, b2)

    # --- single forward evaluation (ODEFunc.forward) ---
    out = jax.block_until_ready(ode_func_forward(t, x, mats, bias))
    ref = reference_forward(x, a_hat, w1, b1, w2, b2)
    assert out.shape == (N_NODES, F_IN)
    assert jnp.allclose(out, ref, atol=1e-5, rtol=1e-5), (out, ref)

    # --- amortized path: 32 Euler steps of the same ODE func in ONE kernel ---
    dt, n_steps = 0.02, 32
    xT = jax.block_until_ready(
        ode_euler_integrate(x, mats, bias, dt=dt, n_steps=n_steps))
    xT_ref = reference_euler(x, a_hat, w1, b1, w2, b2, dt, n_steps)
    assert xT.shape == (N_NODES, F_IN)
    assert jnp.allclose(xT, xT_ref, atol=1e-4, rtol=1e-4), (xT, xT_ref)

    print("KERNEL_OK")
</pallas_src>

<mosaic_0001>
module attributes {stable_mosaic.version = 11 : i64} {
  func.func @gcn_ode_kernel(%arg0: memref<3x8x8xf32, #tpu.memory_space<vmem>>, %arg1: memref<2x8xf32, #tpu.memory_space<vmem>>, %arg2: memref<8x8xf32, #tpu.memory_space<vmem>>, %arg3: memref<8x8xf32, #tpu.memory_space<vmem>>) attributes {dimension_semantics = [], scalar_prefetch = 0 : i64, scratch_operands = 0 : i64, tpu.core_type = #tpu.core_type<tc>} {
    %c0 = arith.constant 0 : index
    %c0_0 = arith.constant 0 : index
    %c0_1 = arith.constant 0 : index
    %0 = vector.load %arg0[%c0, %c0_0, %c0_1] : memref<3x8x8xf32, #tpu.memory_space<vmem>>, vector<1x8x8xf32>
    %1 = vector.shape_cast %0 : vector<1x8x8xf32> to vector<8x8xf32>
    %c1 = arith.constant 1 : index
    %c0_2 = arith.constant 0 : index
    %c0_3 = arith.constant 0 : index
    %2 = vector.load %arg0[%c1, %c0_2, %c0_3] : memref<3x8x8xf32, #tpu.memory_space<vmem>>, vector<1x8x8xf32>
    %3 = vector.shape_cast %2 : vector<1x8x8xf32> to vector<8x8xf32>
    %c2 = arith.constant 2 : index
    %c0_4 = arith.constant 0 : index
    %c0_5 = arith.constant 0 : index
    %4 = vector.load %arg0[%c2, %c0_4, %c0_5] : memref<3x8x8xf32, #tpu.memory_space<vmem>>, vector<1x8x8xf32>
    %5 = vector.shape_cast %4 : vector<1x8x8xf32> to vector<8x8xf32>
    %c0_6 = arith.constant 0 : index
    %c0_7 = arith.constant 0 : index
    %6 = vector.load %arg1[%c0_6, %c0_7] : memref<2x8xf32, #tpu.memory_space<vmem>>, vector<1x8xf32>
    %c1_8 = arith.constant 1 : index
    %c0_9 = arith.constant 0 : index
    %7 = vector.load %arg1[%c1_8, %c0_9] : memref<2x8xf32, #tpu.memory_space<vmem>>, vector<1x8xf32>
    %c0_10 = arith.constant 0 : index
    %c0_11 = arith.constant 0 : index
    %8 = vector.load %arg2[%c0_10, %c0_11] : memref<8x8xf32, #tpu.memory_space<vmem>>, vector<8x8xf32>
    %cst = arith.constant dense<0.000000e+00> : vector<8x8xf32>
    %9 = tpu.matmul %8, %3, %cst {dimension_numbers = #tpu.dot_dimension_numbers<[1], [0], [0], [1], [0, 0, 1, 1], [], []>} : vector<8x8xf32>, vector<8x8xf32>, vector<8x8xf32> -> vector<8x8xf32>
    %cst_12 = arith.constant dense<0.000000e+00> : vector<8x8xf32>
    %10 = tpu.matmul %1, %9, %cst_12 {dimension_numbers = #tpu.dot_dimension_numbers<[1], [0], [0], [1], [0, 0, 1, 1], [], []>} : vector<8x8xf32>, vector<8x8xf32>, vector<8x8xf32> -> vector<8x8xf32>
    %11 = vector.broadcast %6 : vector<1x8xf32> to vector<8x8xf32>
    %12 = arith.addf %10, %11 : vector<8x8xf32>
    %cst_13 = arith.constant 0.000000e+00 : f32
    %13 = vector.broadcast %cst_13 : f32 to vector<8x8xf32>
    %14 = arith.maximumf %12, %13 : vector<8x8xf32>
    %cst_14 = arith.constant dense<0.000000e+00> : vector<8x8xf32>
    %15 = tpu.matmul %14, %5, %cst_14 {dimension_numbers = #tpu.dot_dimension_numbers<[1], [0], [0], [1], [0, 0, 1, 1], [], []>} : vector<8x8xf32>, vector<8x8xf32>, vector<8x8xf32> -> vector<8x8xf32>
    %cst_15 = arith.constant dense<0.000000e+00> : vector<8x8xf32>
    %16 = tpu.matmul %1, %15, %cst_15 {dimension_numbers = #tpu.dot_dimension_numbers<[1], [0], [0], [1], [0, 0, 1, 1], [], []>} : vector<8x8xf32>, vector<8x8xf32>, vector<8x8xf32> -> vector<8x8xf32>
    %17 = vector.broadcast %7 : vector<1x8xf32> to vector<8x8xf32>
    %18 = arith.addf %16, %17 : vector<8x8xf32>
    %c0_16 = arith.constant 0 : index
    %c0_17 = arith.constant 0 : index
    %19 = vector.load %arg3[%c0_16, %c0_17] : memref<8x8xf32, #tpu.memory_space<vmem>>, vector<8x8xf32>
    tpu.vector_store %arg3[%c0_16, %c0_17], %18 {strides = array<i32>} : memref<8x8xf32, #tpu.memory_space<vmem>>, vector<8x8xf32>,
    return
  }
}

</mosaic_0001>

<llo_original>
// kernel: ode_func_forward.1
$region0: #{ode_func_forward.1}
  #allocation0 [shape = 'u32[]', space=smem, size = 0x4, offset = 0x4, fixed_abs, tag = 'smem constant byte address 0x4 - core index']
  #allocation1 [shape = 'u32[144,128]{1,0:T(1,128)}', space=vmem, size = 0x12000, scoped, tag = 'internal scratch']
  %s0 = inlined_call_operand.hbm [shape: f32[3,8,8], index: 0, kind: input, shape index: {}]
  %s1 = inlined_call_operand.vmem [shape: f32[2,8], index: 1, kind: input, shape index: {}]
  %s2 = inlined_call_operand.vmem [shape: f32[8,8], index: 2, kind: input, shape index: {}]
  %s3 = inlined_call_operand.vmem [shape: f32[8,8], index: 3, kind: output, shape index: {}]
  %s4 = sld [smem:[#allocation0]]
  $region26: #{ode_func_forward.1} parent=0
    _
  %s6 = ssub.s32 1, %s4
  %s7 = scalar_select 0, %s6, %s4
  $region1: #{ode_func_forward.1} parent=0
    #allocation2 [shape = 'u8[12288]{0}', space=vmem, size = 0x3000, scoped, tag = 'input window, operand 0, single buffered']
    #allocation3 [shape = 's32[1]{0}', space=sflag, size = 0x4, scoped, tag = 'scoped memory for ode_func_forward.1']
    %8 = vsyncpa [#allocation3], 0
    // Predicated region
    $region2: #{ode_func_forward.1} parent=1 // pred_check
      _
    $region3: #{ode_func_forward.1} parent=1 // pred_check_branch
      %10 = sbr.rel (0) target = $region5
    $region4: #{ode_func_forward.1} parent=1 // pred_region
      %s12 = ssub.s32 384, 384
      %13 = vsyncadd [#allocation3], %s12
      %s14 = sshll.u32 [#allocation2], 4
      %s15 = int_to_ptr.vmem [resolvable:$true] %s14
      %20 = dma.hbm_to_vmem [thread:$0]  %s0, 384, %s15, [#allocation3], 128, 128, 8
    $region5: #{ode_func_forward.1} parent=1 // pred_fallthru
      _
    // Predicated region
    $region6: #{ode_func_forward.1} parent=1 // pred_check
      _
    $region7: #{ode_func_forward.1} parent=1 // pred_check_branch
      %22 = sbr.rel (0) target = $region9
    $region8: #{ode_func_forward.1} parent=1 // pred_region
      _
    $region9: #{ode_func_forward.1} parent=1 // pred_fallthru
      _
    // Predicated region
    $region10: #{ode_func_forward.1} parent=1 // pred_check
      _
    $region11: #{ode_func_forward.1} parent=1 // pred_check_branch
      %24 = sbr.rel (0) target = $region13
    $region12: #{ode_func_forward.1} parent=1 // pred_region
      _
    $region13: #{ode_func_forward.1} parent=1 // pred_fallthru
      _
    // Predicated region
    $region14: #{ode_func_forward.1} parent=1 // pred_check
      _
    $region15: #{ode_func_forward.1} parent=1 // pred_check_branch
      %26 = sbr.rel (0) target = $region17
    $region16: #{ode_func_forward.1} parent=1 // pred_region
      %27 = dma.done [#allocation3], 384
    $region17: #{ode_func_forward.1} parent=1 // pred_fallthru
      _
    %v28 = vld [vmem:[#allocation2] sm:$0xff]
    %s29 = scalar_lea.vmem [#allocation2], 8
    %v30 = vld [vmem:[%s29] sm:$0xff]
    %s31 = scalar_lea.vmem [#allocation2], 16
    %v32 = vld [vmem:[%s31] sm:$0xff]
    %v33 = vld [vmem:[%s1] sm:$0x1]
    %v34 = vld [vmem:[%s1 + $0x1] sm:$0x1]
    %v35 = vld [vmem:[%s2] sm:$0xff]
    %vm36 = vcmask 64512
    %v38 = vsel %vm36, %v35, 0
    %40 = vmatprep.subr.mxu0 0.0
    %41 = vmatpush1.msra.mxu0 %v30
    %42 = vmatprep.subr.mxu0 0.0
    %43 = vmatpush1.msra.mxu0 0.0
    %44 = vmatprep.subr.mxu0 0.0
    %45 = vmatpush1.msra.mxu0 0.0
    %46 = vmatprep.subr.mxu0 0.0
    %47 = vmatpush1.msra.mxu0 0.0
    %48 = vmatprep.subr.mxu0 0.0
    %49 = vmatpush1.msra.mxu0 0.0
    %50 = vmatprep.subr.mxu0 0.0
    %51 = vmatpush1.msra.mxu0 0.0
    %52 = vmatprep.subr.mxu0 0.0
    %53 = vmatpush1.msra.mxu0 0.0
    %54 = vmatprep.subr.mxu0 0.0
    %55 = vmatpush1.msra.mxu0 0.0
    %56 = vmatprep.subr.mxu0 0.0
    %57 = vmatpush1.msra.mxu0 0.0
    %58 = vmatprep.subr.mxu0 0.0
    %59 = vmatpush1.msra.mxu0 0.0
    %60 = vmatprep.subr.mxu0 0.0
    %61 = vmatpush1.msra.mxu0 0.0
    %62 = vmatprep.subr.mxu0 0.0
    %63 = vmatpush1.msra.mxu0 0.0
    %64 = vmatprep.subr.mxu0 0.0
    %65 = vmatpush1.msra.mxu0 0.0
    %66 = vmatprep.subr.mxu0 0.0
    %67 = vmatpush1.msra.mxu0 0.0
    %68 = vmatprep.subr.mxu0 0.0
    %69 = vmatpush1.msra.mxu0 0.0
    %70 = vmatprep.subr.mxu0 0.0
    %71 = vmatpush1.msra.mxu0 0.0
    %72 = vmatprep.subr.mxu0 0.0
    %73 = vmatpush1.msra.mxu0 0.0
    %74 = vmatprep.subr.mxu0 0.0
    %75 = vmatpush1.msra.mxu0 0.0
    %76 = vmatprep.subr.mxu0 0.0
    %77 = vmatpush1.msra.mxu0 0.0
    %78 = vmatprep.subr.mxu0 0.0
    %79 = vmatpush1.msra.mxu0 0.0
    %80 = vmatprep.subr.mxu0 0.0
    %81 = vmatpush1.msra.mxu0 0.0
    %82 = vmatprep.subr.mxu0 0.0
    %83 = vmatpush1.msra.mxu0 0.0
    %84 = vmatprep.subr.mxu0 0.0
    %85 = vmatpush1.msra.mxu0 0.0
    %86 = vmatprep.subr.mxu0 0.0
    %87 = vmatpush1.msra.mxu0 0.0
    %88 = vmatprep.subr.mxu0 0.0
    %89 = vmatpush1.msra.mxu0 0.0
    %90 = vmatprep.subr.mxu0 0.0
    %91 = vmatpush1.msra.mxu0 0.0
    %92 = vmatprep.subr.mxu0 0.0
    %93 = vmatpush1.msra.mxu0 0.0
    %94 = vmatprep.subr.mxu0 0.0
    %95 = vmatpush1.msra.mxu0 0.0
    %96 = vmatprep.subr.mxu0 0.0
    %97 = vmatpush1.msra.mxu0 0.0
    %98 = vmatprep.subr.mxu0 0.0
    %99 = vmatpush1.msra.mxu0 0.0
    %100 = vmatprep.subr.mxu0 0.0
    %101 = vmatpush1.msra.mxu0 0.0
    %102 = vmatprep.subr.mxu0 0.0
    %103 = vmatpush1.msra.mxu0 0.0
    %104 = vmatprep.mubr.f32.mxu0 0.0
    %105 = vmatmul.mubr.f32.gmra.mrb[0].mxu0 %v38
    %v106 = vpop.f32.mrb[0].mxu0
    %v107 = vadd.f32 0.0, %v106
    %v108 = vpop.f32.mrb[0].mxu0
    %109 = vdwg.mxu0
    %v110 = vlaneseq
    %v111 = vshrl.u32 %v110, 7
    %v112 = vsub.s32 0, %v111
    %v113 = vrot.slane %v33, %v112
    %v115 = vsel %vm36, %v28, 0
    %117 = vmatprep.subr.mxu0 0.0
    %118 = vmatpush1.msra.mxu0 %v107
    %119 = vmatprep.subr.mxu0 0.0
    %120 = vmatpush1.msra.mxu0 0.0
    %121 = vmatprep.subr.mxu0 0.0
    %122 = vmatpush1.msra.mxu0 0.0
    %123 = vmatprep.subr.mxu0 0.0
    %124 = vmatpush1.msra.mxu0 0.0
    %125 = vmatprep.subr.mxu0 0.0
    %126 = vmatpush1.msra.mxu0 0.0
    %127 = vmatprep.subr.mxu0 0.0
    %128 = vmatpush1.msra.mxu0 0.0
    %129 = vmatprep.subr.mxu0 0.0
    %130 = vmatpush1.msra.mxu0 0.0
    %131 = vmatprep.subr.mxu0 0.0
    %132 = vmatpush1.msra.mxu0 0.0
    %133 = vmatprep.subr.mxu0 0.0
    %134 = vmatpush1.msra.mxu0 0.0
    %135 = vmatprep.subr.mxu0 0.0
    %136 = vmatpush1.msra.mxu0 0.0
    %137 = vmatprep.subr.mxu0 0.0
    %138 = vmatpush1.msra.mxu0 0.0
    %139 = vmatprep.subr.mxu0 0.0
    %140 = vmatpush1.msra.mxu0 0.0
    %141 = vmatprep.subr.mxu0 0.0
    %142 = vmatpush1.msra.mxu0 0.0
    %143 = vmatprep.subr.mxu0 0.0
    %144 = vmatpush1.msra.mxu0 0.0
    %145 = vmatprep.subr.mxu0 0.0
    %146 = vmatpush1.msra.mxu0 0.0
    %147 = vmatprep.subr.mxu0 0.0
    %148 = vmatpush1.msra.mxu0 0.0
    %149 = vmatprep.subr.mxu0 0.0
    %150 = vmatpush1.msra.mxu0 0.0
    %151 = vmatprep.subr.mxu0 0.0
    %152 = vmatpush1.msra.mxu0 0.0
    %153 = vmatprep.subr.mxu0 0.0
    %154 = vmatpush1.msra.mxu0 0.0
    %155 = vmatprep.subr.mxu0 0.0
    %156 = vmatpush1.msra.mxu0 0.0
    %157 = vmatprep.subr.mxu0 0.0
    %158 = vmatpush1.msra.mxu0 0.0
    %159 = vmatprep.subr.mxu0 0.0
    %160 = vmatpush1.msra.mxu0 0.0
    %161 = vmatprep.subr.mxu0 0.0
    %162 = vmatpush1.msra.mxu0 0.0
    %163 = vmatprep.subr.mxu0 0.0
    %164 = vmatpush1.msra.mxu0 0.0
    %165 = vmatprep.subr.mxu0 0.0
    %166 = vmatpush1.msra.mxu0 0.0
    %167 = vmatprep.subr.mxu0 0.0
    %168 = vmatpush1.msra.mxu0 0.0
    %169 = vmatprep.subr.mxu0 0.0
    %170 = vmatpush1.msra.mxu0 0.0
    %171 = vmatprep.subr.mxu0 0.0
    %172 = vmatpush1.msra.mxu0 0.0
    %173 = vmatprep.subr.mxu0 0.0
    %174 = vmatpush1.msra.mxu0 0.0
    %175 = vmatprep.subr.mxu0 0.0
    %176 = vmatpush1.msra.mxu0 0.0
    %177 = vmatprep.subr.mxu0 0.0
    %178 = vmatpush1.msra.mxu0 0.0
    %179 = vmatprep.subr.mxu0 0.0
    %180 = vmatpush1.msra.mxu0 0.0
    %181 = vmatprep.mubr.f32.mxu0 0.0
    %182 = vmatmul.mubr.f32.gmra.mrb[0].mxu0 %v115
    %v183 = vpop.f32.mrb[0].mxu0
    %v184 = vadd.f32 %v113, %v183
    %v185 = vpop.f32.mrb[0].mxu0
    %186 = vdwg.mxu0
    %v187 = vmax.f32 %v184, 0.0
    %v189 = vsel %vm36, %v187, 0
    %191 = vmatprep.subr.mxu0 0.0
    %192 = vmatpush1.msra.mxu0 %v32
    %193 = vmatprep.subr.mxu0 0.0
    %194 = vmatpush1.msra.mxu0 0.0
    %195 = vmatprep.subr.mxu0 0.0
    %196 = vmatpush1.msra.mxu0 0.0
    %197 = vmatprep.subr.mxu0 0.0
    %198 = vmatpush1.msra.mxu0 0.0
    %199 = vmatprep.subr.mxu0 0.0
    %200 = vmatpush1.msra.mxu0 0.0
    %201 = vmatprep.subr.mxu0 0.0
    %202 = vmatpush1.msra.mxu0 0.0
    %203 = vmatprep.subr.mxu0 0.0
    %204 = vmatpush1.msra.mxu0 0.0
    %205 = vmatprep.subr.mxu0 0.0
    %206 = vmatpush1.msra.mxu0 0.0
    %207 = vmatprep.subr.mxu0 0.0
    %208 = vmatpush1.msra.mxu0 0.0
    %209 = vmatprep.subr.mxu0 0.0
    %210 = vmatpush1.msra.mxu0 0.0
    %211 = vmatprep.subr.mxu0 0.0
    %212 = vmatpush1.msra.mxu0 0.0
    %213 = vmatprep.subr.mxu0 0.0
    %214 = vmatpush1.msra.mxu0 0.0
    %215 = vmatprep.subr.mxu0 0.0
    %216 = vmatpush1.msra.mxu0 0.0
    %217 = vmatprep.subr.mxu0 0.0
    %218 = vmatpush1.msra.mxu0 0.0
    %219 = vmatprep.subr.mxu0 0.0
    %220 = vmatpush1.msra.mxu0 0.0
    %221 = vmatprep.subr.mxu0 0.0
    %222 = vmatpush1.msra.mxu0 0.0
    %223 = vmatprep.subr.mxu0 0.0
    %224 = vmatpush1.msra.mxu0 0.0
    %225 = vmatprep.subr.mxu0 0.0
    %226 = vmatpush1.msra.mxu0 0.0
    %227 = vmatprep.subr.mxu0 0.0
    %228 = vmatpush1.msra.mxu0 0.0
    %229 = vmatprep.subr.mxu0 0.0
    %230 = vmatpush1.msra.mxu0 0.0
    %231 = vmatprep.subr.mxu0 0.0
    %232 = vmatpush1.msra.mxu0 0.0
    %233 = vmatprep.subr.mxu0 0.0
    %234 = vmatpush1.msra.mxu0 0.0
    %235 = vmatprep.subr.mxu0 0.0
    %236 = vmatpush1.msra.mxu0 0.0
    %237 = vmatprep.subr.mxu0 0.0
    %238 = vmatpush1.msra.mxu0 0.0
    %239 = vmatprep.subr.mxu0 0.0
    %240 = vmatpush1.msra.mxu0 0.0
    %241 = vmatprep.subr.mxu0 0.0
    %242 = vmatpush1.msra.mxu0 0.0
    %243 = vmatprep.subr.mxu0 0.0
    %244 = vmatpush1.msra.mxu0 0.0
    %245 = vmatprep.subr.mxu0 0.0
    %246 = vmatpush1.msra.mxu0 0.0
    %247 = vmatprep.subr.mxu0 0.0
    %248 = vmatpush1.msra.mxu0 0.0
    %249 = vmatprep.subr.mxu0 0.0
    %250 = vmatpush1.msra.mxu0 0.0
    %251 = vmatprep.subr.mxu0 0.0
    %252 = vmatpush1.msra.mxu0 0.0
    %253 = vmatprep.subr.mxu0 0.0
    %254 = vmatpush1.msra.mxu0 0.0
    %255 = vmatprep.mubr.f32.mxu0 0.0
    %256 = vmatmul.mubr.f32.gmra.mrb[0].mxu0 %v189
    %v257 = vpop.f32.mrb[0].mxu0
    %v258 = vadd.f32 0.0, %v257
    %v259 = vpop.f32.mrb[0].mxu0
    %260 = vdwg.mxu0
    %v261 = vlaneseq
    %v262 = vshrl.u32 %v261, 7
    %v263 = vsub.s32 0, %v262
    %v264 = vrot.slane %v34, %v263
    %265 = vmatprep.subr.mxu0 0.0
    %266 = vmatpush1.msra.mxu0 %v258
    %267 = vmatprep.subr.mxu0 0.0
    %268 = vmatpush1.msra.mxu0 0.0
    %269 = vmatprep.subr.mxu0 0.0
    %270 = vmatpush1.msra.mxu0 0.0
    %271 = vmatprep.subr.mxu0 0.0
    %272 = vmatpush1.msra.mxu0 0.0
    %273 = vmatprep.subr.mxu0 0.0
    %274 = vmatpush1.msra.mxu0 0.0
    %275 = vmatprep.subr.mxu0 0.0
    %276 = vmatpush1.msra.mxu0 0.0
    %277 = vmatprep.subr.mxu0 0.0
    %278 = vmatpush1.msra.mxu0 0.0
    %279 = vmatprep.subr.mxu0 0.0
    %280 = vmatpush1.msra.mxu0 0.0
    %281 = vmatprep.subr.mxu0 0.0
    %282 = vmatpush1.msra.mxu0 0.0
    %283 = vmatprep.subr.mxu0 0.0
    %284 = vmatpush1.msra.mxu0 0.0
    %285 = vmatprep.subr.mxu0 0.0
    %286 = vmatpush1.msra.mxu0 0.0
    %287 = vmatprep.subr.mxu0 0.0
    %288 = vmatpush1.msra.mxu0 0.0
    %289 = vmatprep.subr.mxu0 0.0
    %290 = vmatpush1.msra.mxu0 0.0
    %291 = vmatprep.subr.mxu0 0.0
    %292 = vmatpush1.msra.mxu0 0.0
    %293 = vmatprep.subr.mxu0 0.0
    %294 = vmatpush1.msra.mxu0 0.0
    %295 = vmatprep.subr.mxu0 0.0
    %296 = vmatpush1.msra.mxu0 0.0
    %297 = vmatprep.subr.mxu0 0.0
    %298 = vmatpush1.msra.mxu0 0.0
    %299 = vmatprep.subr.mxu0 0.0
    %300 = vmatpush1.msra.mxu0 0.0
    %301 = vmatprep.subr.mxu0 0.0
    %302 = vmatpush1.msra.mxu0 0.0
    %303 = vmatprep.subr.mxu0 0.0
    %304 = vmatpush1.msra.mxu0 0.0
    %305 = vmatprep.subr.mxu0 0.0
    %306 = vmatpush1.msra.mxu0 0.0
    %307 = vmatprep.subr.mxu0 0.0
    %308 = vmatpush1.msra.mxu0 0.0
    %309 = vmatprep.subr.mxu0 0.0
    %310 = vmatpush1.msra.mxu0 0.0
    %311 = vmatprep.subr.mxu0 0.0
    %312 = vmatpush1.msra.mxu0 0.0
    %313 = vmatprep.subr.mxu0 0.0
    %314 = vmatpush1.msra.mxu0 0.0
    %315 = vmatprep.subr.mxu0 0.0
    %316 = vmatpush1.msra.mxu0 0.0
    %317 = vmatprep.subr.mxu0 0.0
    %318 = vmatpush1.msra.mxu0 0.0
    %319 = vmatprep.subr.mxu0 0.0
    %320 = vmatpush1.msra.mxu0 0.0
    %321 = vmatprep.subr.mxu0 0.0
    %322 = vmatpush1.msra.mxu0 0.0
    %323 = vmatprep.subr.mxu0 0.0
    %324 = vmatpush1.msra.mxu0 0.0
    %325 = vmatprep.subr.mxu0 0.0
    %326 = vmatpush1.msra.mxu0 0.0
    %327 = vmatprep.subr.mxu0 0.0
    %328 = vmatpush1.msra.mxu0 0.0
    %329 = vmatprep.mubr.f32.mxu0 0.0
    %330 = vmatmul.mubr.f32.gmra.mrb[0].mxu0 %v115
    %v331 = vpop.f32.mrb[0].mxu0
    %v332 = vadd.f32 %v264, %v331
    %v333 = vpop.f32.mrb[0].mxu0
    %334 = vdwg.mxu0
    %335 = vst.msk [vmem:[%s3] sm:$0xff] %vm36, %v332
    // Predicated region
    $region18: #{ode_func_forward.1} parent=1 // pred_check
      _
    $region19: #{ode_func_forward.1} parent=1 // pred_check_branch
      %337 = sbr.rel (0) target = $region21
    $region20: #{ode_func_forward.1} parent=1 // pred_region
      _
    $region21: #{ode_func_forward.1} parent=1 // pred_fallthru
      _
    // Predicated region
    $region22: #{ode_func_forward.1} parent=1 // pred_check
      _
    $region23: #{ode_func_forward.1} parent=1 // pred_check_branch
      %339 = sbr.rel (0) target = $region25
    $region24: #{ode_func_forward.1} parent=1 // pred_region
      _
    $region25: #{ode_func_forward.1} parent=1 // pred_fallthru
      _
    %340 = vsyncpa [#allocation3], 1

</llo_original>
